<compile_context>
chip_gen: v7x
topology: tpu7x:2x2x1
jax: 0.10.0
libtpu: 0.0.40
codegen_flags: <defaults>
</compile_context>

<pallas_src>
import functools

import jax
import jax.numpy as jnp
from jax.experimental import pallas as pl
from jax.experimental.pallas import tpu as pltpu

_SUB = 16    # sublane granularity (bf16-friendly, multiple of f32's 8)
_LANE = 128  # lane granularity


def _round_up(n: int, k: int) -> int:
    return ((n + k - 1) // k) * k


def _choose_tiling(batch: int):
    """Row tile / grid rows: cdiv-robust, >=2 steps for mid/large B (v7x TCs)."""
    b = _round_up(max(batch, 1), _SUB)
    if b <= _SUB:                                  # tiny batch -> single step
        return b, 1
    tile = min(1024, _round_up(pl.cdiv(b, 2), _SUB))
    grid = pl.cdiv(b, tile)
    return tile, grid


def _write_head_kernel(x_ref, w_ref, out_ref, *, M: int):
    """Fused (linear + folded bias) matmul + per-group activations.

    x_ref:   (tile_b, C_pad) bf16 — controller output, zero-padded, with a
             ones column at index C so the bias row folded into w applies.
    w_ref:   (C_pad, P_pad) bf16 — weight (transposed) with bias as row C.
    out_ref: (tile_b, P_pad) f32 — activated write-parameter slab.
    """
    z = jnp.dot(x_ref[...], w_ref[...], preferred_element_type=jnp.float32)

    # (1, P_pad) column ids — broadcast inside the selects (no full-tile iota).
    col = jax.lax.broadcasted_iota(jnp.int32, (1, z.shape[1]), 1)

    # One shared exp(-|z|) feeds both the stable softplus and the stable
    # sigmoid; a single full-width divide serves both sigmoid branches.
    en = jnp.exp(-jnp.abs(z))                        # in (0, 1], never overflows
    softplus = jnp.maximum(z, 0.0) + jnp.log1p(en)   # log(1 + exp(z))
    d = 1.0 / (1.0 + en)
    sigm = jnp.where(z >= 0.0, d, en * d)

    # Softmax restricted to the 3 shift columns [M+2, M+5).  Arguments are
    # masked *before* exponentiation (<= 0 on shift cols, exp(-inf) = 0 off
    # them) and the denominator is inverted on the narrow (tile_b, 1) column.
    shift_mask = (col >= M + 2) & (col < M + 5)
    m = jnp.max(jnp.where(shift_mask, z, -jnp.inf), axis=1, keepdims=True)
    e = jnp.exp(jnp.where(shift_mask, z - m, -jnp.inf))
    soft = e * (1.0 / jnp.sum(e, axis=1, keepdims=True))

    # Column-group select; key / add / pad columns keep raw z.
    sp_mask = (col == M) | (col == M + 5)                             # beta, gamma
    gamma_add = jnp.where(col == M + 5, 1.0, 0.0)                     # gamma = 1 + softplus
    sig_mask = (col == M + 1) | ((col >= M + 6) & (col < 2 * M + 6))  # g, erase

    out = z
    out = jnp.where(sp_mask, softplus + gamma_add, out)
    out = jnp.where(sig_mask, sigm, out)
    out = jnp.where(shift_mask, soft, out)
    out_ref[...] = out.astype(out_ref.dtype)


def prepare_write_head_params(w_t, b):
    """Pad / fold / cast the Linear(C, P) parameters ONCE (outside the
    per-timestep loop).  Returns a (C_pad, P_pad) bf16 slab with the bias
    folded in as row C; everything else is zero-padded."""
    C, P = w_t.shape
    b = jnp.reshape(b, (P,))
    C_pad = _round_up(C + 1, _LANE)
    P_pad = _round_up(P, _LANE)
    w_slab = jnp.zeros((C_pad, P_pad), jnp.float32)
    w_slab = w_slab.at[:C, :P].set(w_t.astype(jnp.float32))
    w_slab = w_slab.at[C, :P].set(b.astype(jnp.float32))
    return w_slab.astype(jnp.bfloat16)


@functools.partial(jax.jit, static_argnames=("M",))
def ntm_write_head_forward(x, w_slab, *, M: int):
    """Returns (key_vec, beta, g, s, gamma, erase_vec, add_vec)."""
    B, C = x.shape
    C_pad, P_pad = w_slab.shape
    P = 3 * M + 6
    assert C + 1 <= C_pad and P <= P_pad

    tile_b, grid_rows = _choose_tiling(B)
    B_pad = tile_b * grid_rows

    # Per-call activation padding only (parameters were padded at init time):
    # zero rows/cols plus a ones column at index C that applies the folded bias.
    x_aug = jnp.concatenate([x, jnp.ones((B, 1), x.dtype)], axis=1)
    x_p = jnp.zeros((B_pad, C_pad), jnp.bfloat16)
    x_p = x_p.at[:B, :C + 1].set(x_aug.astype(jnp.bfloat16))

    out = pl.pallas_call(
        functools.partial(_write_head_kernel, M=M),
        out_shape=jax.ShapeDtypeStruct((B_pad, P_pad), jnp.float32),
        grid=(grid_rows,),
        in_specs=[
            pl.BlockSpec((tile_b, C_pad), lambda i: (i, 0)),
            pl.BlockSpec((C_pad, P_pad), lambda i: (0, 0)),
        ],
        out_specs=pl.BlockSpec((tile_b, P_pad), lambda i: (i, 0)),
        compiler_params=pltpu.CompilerParams(
            dimension_semantics=("parallel",)),
        cost_estimate=pl.CostEstimate(            # true (unpadded) work
            flops=2 * B * (C + 1) * P,
            transcendentals=3 * B * P,
            bytes_accessed=2 * B * (C + 1) + 2 * C_pad * P_pad + 4 * B * P),
    )(x_p, w_slab)

    out = out[:B, :P]
    # Column splits (plain-JAX glue mirroring _split_cols([M,1,1,3,1,M,M])).
    key_vec = out[:, 0:M]
    beta = out[:, M:M + 1]
    g = out[:, M + 1:M + 2]
    s = out[:, M + 2:M + 5]
    gamma = out[:, M + 5:M + 6]
    erase_vec = out[:, M + 6:2 * M + 6]
    add_vec = out[:, 2 * M + 6:3 * M + 6]
    return key_vec, beta, g, s, gamma, erase_vec, add_vec


def _reference(x, w_t, b, M):
    # Matmul inputs quantized to bf16 to match the kernel's MXU input path;
    # accumulation and all activations stay f32.
    xq = x.astype(jnp.bfloat16).astype(jnp.float32)
    wq = w_t.astype(jnp.bfloat16).astype(jnp.float32)
    bq = b.astype(jnp.bfloat16).astype(jnp.float32)
    z = xq @ wq + bq
    key = z[:, :M]
    beta = jax.nn.softplus(z[:, M:M + 1])
    g = jax.nn.sigmoid(z[:, M + 1:M + 2])
    s = jax.nn.softmax(z[:, M + 2:M + 5], axis=1)
    gamma = 1.0 + jax.nn.softplus(z[:, M + 5:M + 6])
    erase = jax.nn.sigmoid(z[:, M + 6:2 * M + 6])
    add = z[:, 2 * M + 6:]
    return key, beta, g, s, gamma, erase, add


if __name__ == "__main__":
    # Small shapes implied by the module: N addresses, M address dim,
    # controller output size C, batch B.
    B, C, N, M = 4, 32, 16, 8
    P = 3 * M + 6  # = sum([M, 1, 1, 3, 1, M, M]) = 30

    key0 = jax.random.PRNGKey(0)
    kx, kw, kb = jax.random.split(key0, 3)

    # Deterministic init matching nn.init.xavier_uniform(gain=1.4) and
    # nn.init.normal(std=0.01) on a Linear(C, P).
    gain = 1.4
    bound = gain * (6.0 / (C + P)) ** 0.5
    w = jax.random.uniform(kw, (P, C), jnp.float32, -bound, bound)  # torch (out, in)
    w_t = w.T                                                        # (C, P)
    b = (0.01 * jax.random.normal(kb, (P,), jnp.float32)).reshape(1, P)
    # initial_address_vec / prev_address_vec state (zeros(N)); only consumed by
    # the external memory addressing, kept here for completeness.
    prev_address_vec = jnp.zeros((N,), jnp.float32)

    # Parameters padded / folded / cast ONCE, outside the per-timestep path.
    w_slab = prepare_write_head_params(w_t, b)

    x = jax.random.normal(kx, (B, C), jnp.float32)

    outs = ntm_write_head_forward(x, w_slab, M=M)
    outs = jax.block_until_ready(outs)

    refs = _reference(x, w_t, b, M)
    for o, r in zip(outs, refs):
        assert o.shape == r.shape
        assert jnp.max(jnp.abs(o - r)) < 2e-5

    print("KERNEL_OK")
</pallas_src>

<mosaic_0001>
module attributes {stable_mosaic.version = 11 : i64} {
  func.func @_write_head_kernel(%arg0: i32, %arg1: memref<16x128xbf16, #tpu.memory_space<vmem>>, %arg2: memref<128x128xbf16, #tpu.memory_space<vmem>>, %arg3: memref<16x128xf32, #tpu.memory_space<vmem>>) attributes {dimension_semantics = [#tpu.dimension_semantics<parallel>], iteration_bounds = array<i64: 1>, scalar_prefetch = 0 : i64, scratch_operands = 0 : i64, tpu.core_type = #tpu.core_type<tc>, window_params = [{transform_indices = @transform_0, window_bounds = array<i64: 16, 128>}, {pipeline_mode = #tpu.pipeline_mode<synchronous>, transform_indices = @transform_1, window_bounds = array<i64: 128, 128>}, {transform_indices = @transform_2, window_bounds = array<i64: 16, 128>}]} {
    %c0 = arith.constant 0 : index
    %c0_0 = arith.constant 0 : index
    %0 = vector.load %arg1[%c0, %c0_0] : memref<16x128xbf16, #tpu.memory_space<vmem>>, vector<16x128xbf16>
    %c0_1 = arith.constant 0 : index
    %c0_2 = arith.constant 0 : index
    %1 = vector.load %arg2[%c0_1, %c0_2] : memref<128x128xbf16, #tpu.memory_space<vmem>>, vector<128x128xbf16>
    %cst = arith.constant dense<0.000000e+00> : vector<16x128xf32>
    %2 = tpu.matmul %0, %1, %cst {dimension_numbers = #tpu.dot_dimension_numbers<[1], [0], [0], [1], [0, 0, 1, 1], [], []>} : vector<16x128xbf16>, vector<128x128xbf16>, vector<16x128xf32> -> vector<16x128xf32>
    %3 = tpu.iota {dimensions = array<i32: 1>} : vector<1x128xi32>
    %4 = math.absf %2 : vector<16x128xf32>
    %cst_3 = arith.constant 0.000000e+00 : f32
    %5 = vector.broadcast %cst_3 : f32 to vector<16x128xf32>
    %6 = arith.subf %5, %4 : vector<16x128xf32>
    %7 = math.exp %6 : vector<16x128xf32>
    %cst_4 = arith.constant 0.000000e+00 : f32
    %8 = vector.broadcast %cst_4 : f32 to vector<16x128xf32>
    %9 = arith.maximumf %2, %8 : vector<16x128xf32>
    %10 = math.log1p %7 : vector<16x128xf32>
    %11 = arith.addf %9, %10 : vector<16x128xf32>
    %cst_5 = arith.constant 1.000000e+00 : f32
    %12 = vector.broadcast %cst_5 : f32 to vector<16x128xf32>
    %13 = arith.addf %12, %7 : vector<16x128xf32>
    %cst_6 = arith.constant 1.000000e+00 : f32
    %14 = vector.broadcast %cst_6 : f32 to vector<16x128xf32>
    %15 = arith.divf %14, %13 : vector<16x128xf32>
    %cst_7 = arith.constant 0.000000e+00 : f32
    %16 = vector.broadcast %cst_7 : f32 to vector<16x128xf32>
    %17 = arith.cmpf oge, %2, %16 : vector<16x128xf32>
    %18 = arith.mulf %7, %15 : vector<16x128xf32>
    %19 = arith.select %17, %15, %18 : vector<16x128xi1>, vector<16x128xf32>
    %c10_i32 = arith.constant 10 : i32
    %20 = vector.broadcast %c10_i32 : i32 to vector<1x128xi32>
    %21 = arith.cmpi sge, %3, %20 : vector<1x128xi32>
    %c13_i32 = arith.constant 13 : i32
    %22 = vector.broadcast %c13_i32 : i32 to vector<1x128xi32>
    %23 = arith.cmpi slt, %3, %22 : vector<1x128xi32>
    %24 = arith.andi %21, %23 : vector<1x128xi1>
    %cst_8 = arith.constant 0xFF800000 : f32
    %25 = vector.shape_cast %24 : vector<1x128xi1> to vector<1x128xi1>
    %26 = vector.broadcast %25 : vector<1x128xi1> to vector<16x128xi1>
    %27 = vector.broadcast %cst_8 : f32 to vector<16x128xf32>
    %28 = arith.select %26, %2, %27 : vector<16x128xi1>, vector<16x128xf32>
    %cst_9 = arith.constant dense<0xFF800000> : vector<16xf32>
    %29 = vector.multi_reduction <maximumf>, %28, %cst_9 [1] : vector<16x128xf32> to vector<16xf32>
    %30 = vector.shape_cast %29 : vector<16xf32> to vector<16x1xf32>
    %31 = vector.broadcast %30 : vector<16x1xf32> to vector<16x128xf32>
    %32 = arith.subf %2, %31 : vector<16x128xf32>
    %cst_10 = arith.constant 0xFF800000 : f32
    %33 = vector.shape_cast %24 : vector<1x128xi1> to vector<1x128xi1>
    %34 = vector.broadcast %33 : vector<1x128xi1> to vector<16x128xi1>
    %35 = vector.broadcast %cst_10 : f32 to vector<16x128xf32>
    %36 = arith.select %34, %32, %35 : vector<16x128xi1>, vector<16x128xf32>
    %37 = math.exp %36 : vector<16x128xf32>
    %cst_11 = arith.constant dense<0.000000e+00> : vector<16xf32>
    %38 = vector.multi_reduction <add>, %37, %cst_11 [1] : vector<16x128xf32> to vector<16xf32>
    %39 = vector.shape_cast %38 : vector<16xf32> to vector<16x1xf32>
    %cst_12 = arith.constant 1.000000e+00 : f32
    %40 = vector.broadcast %cst_12 : f32 to vector<16x1xf32>
    %41 = arith.divf %40, %39 : vector<16x1xf32>
    %42 = vector.broadcast %41 : vector<16x1xf32> to vector<16x128xf32>
    %43 = arith.mulf %37, %42 : vector<16x128xf32>
    %c8_i32 = arith.constant 8 : i32
    %44 = vector.broadcast %c8_i32 : i32 to vector<1x128xi32>
    %45 = arith.cmpi eq, %3, %44 : vector<1x128xi32>
    %c13_i32_13 = arith.constant 13 : i32
    %46 = vector.broadcast %c13_i32_13 : i32 to vector<1x128xi32>
    %47 = arith.cmpi eq, %3, %46 : vector<1x128xi32>
    %48 = arith.ori %45, %47 : vector<1x128xi1>
    %c13_i32_14 = arith.constant 13 : i32
    %49 = vector.broadcast %c13_i32_14 : i32 to vector<1x128xi32>
    %50 = arith.cmpi eq, %3, %49 : vector<1x128xi32>
    %cst_15 = arith.constant 1.000000e+00 : f32
    %cst_16 = arith.constant 0.000000e+00 : f32
    %51 = vector.broadcast %cst_15 : f32 to vector<1x128xf32>
    %52 = vector.broadcast %cst_16 : f32 to vector<1x128xf32>
    %53 = arith.select %50, %51, %52 : vector<1x128xi1>, vector<1x128xf32>
    %c9_i32 = arith.constant 9 : i32
    %54 = vector.broadcast %c9_i32 : i32 to vector<1x128xi32>
    %55 = arith.cmpi eq, %3, %54 : vector<1x128xi32>
    %c14_i32 = arith.constant 14 : i32
    %56 = vector.broadcast %c14_i32 : i32 to vector<1x128xi32>
    %57 = arith.cmpi sge, %3, %56 : vector<1x128xi32>
    %c22_i32 = arith.constant 22 : i32
    %58 = vector.broadcast %c22_i32 : i32 to vector<1x128xi32>
    %59 = arith.cmpi slt, %3, %58 : vector<1x128xi32>
    %60 = arith.andi %57, %59 : vector<1x128xi1>
    %61 = arith.ori %55, %60 : vector<1x128xi1>
    %62 = vector.broadcast %53 : vector<1x128xf32> to vector<16x128xf32>
    %63 = arith.addf %11, %62 : vector<16x128xf32>
    %64 = vector.shape_cast %48 : vector<1x128xi1> to vector<1x128xi1>
    %65 = vector.broadcast %64 : vector<1x128xi1> to vector<16x128xi1>
    %66 = arith.select %65, %63, %2 : vector<16x128xi1>, vector<16x128xf32>
    %67 = vector.shape_cast %61 : vector<1x128xi1> to vector<1x128xi1>
    %68 = vector.broadcast %67 : vector<1x128xi1> to vector<16x128xi1>
    %69 = arith.select %68, %19, %66 : vector<16x128xi1>, vector<16x128xf32>
    %70 = vector.shape_cast %24 : vector<1x128xi1> to vector<1x128xi1>
    %71 = vector.broadcast %70 : vector<1x128xi1> to vector<16x128xi1>
    %72 = arith.select %71, %43, %69 : vector<16x128xi1>, vector<16x128xf32>
    %c0_17 = arith.constant 0 : index
    %c0_18 = arith.constant 0 : index
    %73 = vector.load %arg3[%c0_17, %c0_18] : memref<16x128xf32, #tpu.memory_space<vmem>>, vector<16x128xf32>
    tpu.vector_store %arg3[%c0_17, %c0_18], %72 {strides = array<i32>} : memref<16x128xf32, #tpu.memory_space<vmem>>, vector<16x128xf32>,
    return
  }
  func.func @transform_0(%arg0: i32) -> (i32, i32) {
    %c0_i32 = arith.constant 0 : i32
    %c0_i32_0 = arith.constant 0 : i32
    return %arg0, %c0_i32 : i32, i32
  }
  func.func @transform_1(%arg0: i32) -> (i32, i32) {
    %c0_i32 = arith.constant 0 : i32
    %c0_i32_0 = arith.constant 0 : i32
    %c0_i32_1 = arith.constant 0 : i32
    return %c0_i32, %c0_i32_0 : i32, i32
  }
  func.func @transform_2(%arg0: i32) -> (i32, i32) {
    %c0_i32 = arith.constant 0 : i32
    %c0_i32_0 = arith.constant 0 : i32
    return %arg0, %c0_i32 : i32, i32
  }
}

</mosaic_0001>

<llo_original>
// kernel: ntm_write_head_forward.1
$region0: #{ntm_write_head_forward.1}
  #allocation0 [shape = 'u32[]', space=smem, size = 0x4, offset = 0x4, fixed_abs, tag = 'smem constant byte address 0x4 - core index']
  #allocation1 [shape = 'u32[144,128]{1,0:T(1,128)}', space=vmem, size = 0x12000, scoped, tag = 'internal scratch']
  %s0 = inlined_call_operand.vmem [shape: bf16[16,128], index: 0, kind: input, shape index: {}]
  %s1 = inlined_call_operand.hbm [shape: bf16[128,128], index: 1, kind: input, shape index: {}]
  %s2 = inlined_call_operand.vmem [shape: f32[16,128], index: 2, kind: output, shape index: {}]
  %s3 = sld [smem:[#allocation0]]
  $region22: #{ntm_write_head_forward.1} parent=0
    _
  %s5 = ssub.s32 1, %s3
  %s6 = scalar_select 0, %s5, %s3
  $region1: #{ntm_write_head_forward.1} parent=0
    #allocation2 [shape = 'u8[32768]{0}', space=vmem, size = 0x8000, scoped, tag = 'input window, operand 1, single buffered']
    #allocation3 [shape = 's32[1]{0}', space=sflag, size = 0x4, scoped, tag = 'scoped memory for ntm_write_head_forward.1']
    %7 = vsyncpa [#allocation3], 0
    // Predicated region
    $region2: #{ntm_write_head_forward.1} parent=1 // pred_check
      _
    $region3: #{ntm_write_head_forward.1} parent=1 // pred_check_branch
      %9 = sbr.rel (0) target = $region5
    $region4: #{ntm_write_head_forward.1} parent=1 // pred_region
      _
    $region5: #{ntm_write_head_forward.1} parent=1 // pred_fallthru
      _
    // Predicated region
    $region6: #{ntm_write_head_forward.1} parent=1 // pred_check
      _
    $region7: #{ntm_write_head_forward.1} parent=1 // pred_check_branch
      %11 = sbr.rel (0) target = $region9
    $region8: #{ntm_write_head_forward.1} parent=1 // pred_region
      %s13 = ssub.s32 1024, 1024
      %14 = vsyncadd [#allocation3], %s13
      %s15 = sshll.u32 [#allocation2], 4
      %s16 = int_to_ptr.vmem [resolvable:$true] %s15
      %21 = dma.hbm_to_vmem [thread:$0]  %s1, 1024, %s16, [#allocation3], 64, 64, 4
    $region9: #{ntm_write_head_forward.1} parent=1 // pred_fallthru
      _
    // Predicated region
    $region10: #{ntm_write_head_forward.1} parent=1 // pred_check
      _
    $region11: #{ntm_write_head_forward.1} parent=1 // pred_check_branch
      %23 = sbr.rel (0) target = $region13
    $region12: #{ntm_write_head_forward.1} parent=1 // pred_region
      %24 = dma.done [#allocation3], 1024
    $region13: #{ntm_write_head_forward.1} parent=1 // pred_fallthru
      _
    %v26 = vld [vmem:[%s0] sm:$0xf]
    %v27 = vld [vmem:[%s0 + $0x4] sm:$0xf]
    %v28 = vld [vmem:[#allocation2] sm:$0xf]
    %v29 = vld [vmem:[#allocation2 + $0x4] sm:$0xf]
    %v30 = vld [vmem:[#allocation2 + $0x8] sm:$0xf]
    %v31 = vld [vmem:[#allocation2 + $0xc] sm:$0xf]
    %v32 = vld [vmem:[#allocation2 + $0x10] sm:$0xf]
    %v33 = vld [vmem:[#allocation2 + $0x14] sm:$0xf]
    %v34 = vld [vmem:[#allocation2 + $0x18] sm:$0xf]
    %v35 = vld [vmem:[#allocation2 + $0x1c] sm:$0xf]
    %v36 = vld [vmem:[#allocation2 + $0x20] sm:$0xf]
    %v37 = vld [vmem:[#allocation2 + $0x24] sm:$0xf]
    %v38 = vld [vmem:[#allocation2 + $0x28] sm:$0xf]
    %v39 = vld [vmem:[#allocation2 + $0x2c] sm:$0xf]
    %v40 = vld [vmem:[#allocation2 + $0x30] sm:$0xf]
    %v41 = vld [vmem:[#allocation2 + $0x34] sm:$0xf]
    %v42 = vld [vmem:[#allocation2 + $0x38] sm:$0xf]
    %v43 = vld [vmem:[#allocation2 + $0x3c] sm:$0xf]
    %v46 = vunpack.c.l.b16 %v26
    %v47 = vunpack.c.l.b16 %v27
    %v48 = vpack.c.b16 %v47, %v46
    %v66 = vunpack.c.l.b16 %v28
    %v67 = vunpack.c.l.b16 %v29
    %v68 = vunpack.c.l.b16 %v30
    %v69 = vunpack.c.l.b16 %v31
    %v70 = vunpack.c.l.b16 %v32
    %v71 = vunpack.c.l.b16 %v33
    %v72 = vunpack.c.l.b16 %v34
    %v73 = vunpack.c.l.b16 %v35
    %v74 = vunpack.c.l.b16 %v36
    %v75 = vunpack.c.l.b16 %v37
    %v76 = vunpack.c.l.b16 %v38
    %v77 = vunpack.c.l.b16 %v39
    %v78 = vunpack.c.l.b16 %v40
    %v79 = vunpack.c.l.b16 %v41
    %v80 = vunpack.c.l.b16 %v42
    %v81 = vunpack.c.l.b16 %v43
    %v82 = vpack.c.b16 %v67, %v66
    %v83 = vpack.c.b16 %v69, %v68
    %v84 = vpack.c.b16 %v71, %v70
    %v85 = vpack.c.b16 %v73, %v72
    %v86 = vpack.c.b16 %v75, %v74
    %v87 = vpack.c.b16 %v77, %v76
    %v88 = vpack.c.b16 %v79, %v78
    %v89 = vpack.c.b16 %v81, %v80
    %98 = vmatprep.subr.bf16.mxu0 0
    %99 = vmatpush1.bf16.msra.mxu0 %v82
    %100 = vmatprep.subr.bf16.mxu0 0
    %101 = vmatpush1.bf16.msra.mxu0 %v83
    %102 = vmatprep.subr.bf16.mxu0 0
    %103 = vmatpush1.bf16.msra.mxu0 %v84
    %104 = vmatprep.subr.bf16.mxu0 0
    %105 = vmatpush1.bf16.msra.mxu0 %v85
    %106 = vmatprep.subr.bf16.mxu0 0
    %107 = vmatpush1.bf16.msra.mxu0 %v86
    %108 = vmatprep.subr.bf16.mxu0 0
    %109 = vmatpush1.bf16.msra.mxu0 %v87
    %110 = vmatprep.subr.bf16.mxu0 0
    %111 = vmatpush1.bf16.msra.mxu0 %v88
    %112 = vmatprep.subr.bf16.mxu0 0
    %113 = vmatpush1.bf16.msra.mxu0 %v89
    %114 = vmatprep.subr.bf16.mxu0 0
    %115 = vmatpush1.bf16.msra.mxu0 0
    %116 = vmatprep.subr.bf16.mxu0 0
    %117 = vmatpush1.bf16.msra.mxu0 0
    %118 = vmatprep.subr.bf16.mxu0 0
    %119 = vmatpush1.bf16.msra.mxu0 0
    %120 = vmatprep.subr.bf16.mxu0 0
    %121 = vmatpush1.bf16.msra.mxu0 0
    %122 = vmatprep.subr.bf16.mxu0 0
    %123 = vmatpush1.bf16.msra.mxu0 0
    %124 = vmatprep.subr.bf16.mxu0 0
    %125 = vmatpush1.bf16.msra.mxu0 0
    %126 = vmatprep.subr.bf16.mxu0 0
    %127 = vmatpush1.bf16.msra.mxu0 0
    %128 = vmatprep.subr.bf16.mxu0 0
    %129 = vmatpush1.bf16.msra.mxu0 0
    %130 = vmatprep.mubr.bf16.mxu0 0
    %131 = vmatmul.mubr.bf16.gmra.mrb[0].mxu0 %v48
    %v132 = vpop.f32.mrb[0].mxu0
    %v133 = vadd.f32 0.0, %v132
    %v134 = vpop.f32.mrb[0].mxu0
    %v135 = vpop.f32.mrb[0].mxu0
    %v136 = vadd.f32 0.0, %v135
    %v137 = vpop.f32.mrb[0].mxu0
    %138 = vdwg.mxu0
    %v139 = vlaneseq
    %v140 = vand.u32 %v139, 127
    %v141 = vand.u32 2147483647, %v133
    %v142 = vand.u32 2147483647, %v136
    %v143 = vsub.f32 0.0, %v141
    %v144 = vsub.f32 0.0, %v142
    %v145 = vmul.f32 %v143, 1.442695
    %v146 = vpow.pop %v145
    %v147 = vmul.f32 %v144, 1.442695
    %v148 = vpow.pop %v147
    %v149 = vmax.f32 %v133, 0.0
    %v150 = vmax.f32 %v136, 0.0
    %v151 = vadd.f32 %v146, 1.0
    %v152 = vlog2.pop %v151
    %v153 = vmul.f32 %v152, 0.6931472
    %v154 = vmul.f32 -0.5, %v146
    %v155 = vadd.f32 %v154, 1.0
    %v156 = vmul.f32 %v155, %v146
    %v157 = vand.u32 2147483647, %v146
    %vm158 = vcmp.lt.f32.partialorder %v157, 0.0004427343
    %v159 = vsel %vm158, %v156, %v153
    %v160 = vadd.f32 %v148, 1.0
    %v161 = vlog2.pop %v160
    %v162 = vmul.f32 %v161, 0.6931472
    %v163 = vmul.f32 -0.5, %v148
    %v164 = vadd.f32 %v163, 1.0
    %v165 = vmul.f32 %v164, %v148
    %v166 = vand.u32 2147483647, %v148
    %vm167 = vcmp.lt.f32.partialorder %v166, 0.0004427343
    %v168 = vsel %vm167, %v165, %v162
    %v169 = vadd.f32 %v149, %v159
    %v170 = vadd.f32 %v150, %v168
    %v171 = vadd.f32 %v146, 1.0
    %v172 = vadd.f32 %v148, 1.0
    %v173 = vrcp.pop %v171
    %v174 = vmul.f32 1.0, %v173
    %v175 = vrcp.pop %v172
    %v176 = vmul.f32 1.0, %v175
    %vm177 = vcmp.ge.f32.partialorder %v133, 0.0
    %vm178 = vcmp.ge.f32.partialorder %v136, 0.0
    %v179 = vmul.f32 %v146, %v174
    %v180 = vmul.f32 %v148, %v176
    %v181 = vsel %vm177, %v174, %v179
    %v182 = vsel %vm178, %v176, %v180
    %vm183 = vcmp.ge.s32.totalorder %v140, 10
    %vm184 = vcmp.lt.s32.totalorder %v140, 13
    %vm185 = vmand %vm183, %vm184
    %v186 = vsel %vm185, 1, 0
    %vm187 = vcmp.eq.s32.totalorder %v186, 1
    %v188 = vsel %vm187, %v133, -inf
    %v189 = vsel %vm187, %v136, -inf
    %190 = vmax.xlane.f32.xlu0 %v188
    %v191 = vpop.xlane.xlu0 %190
    %192 = vmax.xlane.f32.xlu0 %v189
    %v193 = vpop.xlane.xlu0 %192
    %v194 = vsub.f32 %v133, %v191
    %v195 = vsub.f32 %v136, %v193
    %v196 = vsel %vm187, %v194, -inf
    %v197 = vsel %vm187, %v195, -inf
    %v198 = vmul.f32 %v196, 1.442695
    %v199 = vpow.pop %v198
    %v200 = vmul.f32 %v197, 1.442695
    %v201 = vpow.pop %v200
    %202 = vadd.xlane.f32.xlu0 %v199
    %v203 = vpop.xlane.xlu0 %202
    %204 = vadd.xlane.f32.xlu0 %v201
    %v205 = vpop.xlane.xlu0 %204
    %v206 = vrcp.pop %v203
    %v207 = vmul.f32 1.0, %v206
    %v208 = vrcp.pop %v205
    %v209 = vmul.f32 1.0, %v208
    %v210 = vmul.f32 %v199, %v207
    %v211 = vmul.f32 %v201, %v209
    %vm212 = vcmp.eq.s32.totalorder %v140, 8
    %vm213 = vcmp.eq.s32.totalorder %v140, 13
    %vm214 = vmor %vm212, %vm213
    %v215 = vsel %vm213, 1.0, 0.0
    %vm216 = vcmp.eq.s32.totalorder %v140, 9
    %vm217 = vcmp.ge.s32.totalorder %v140, 14
    %vm218 = vcmp.lt.s32.totalorder %v140, 22
    %vm219 = vmand %vm217, %vm218
    %vm220 = vmor %vm216, %vm219
    %v221 = vadd.f32 %v169, %v215
    %v222 = vadd.f32 %v170, %v215
    %v223 = vsel %vm214, 1, 0
    %vm224 = vcmp.eq.s32.totalorder %v223, 1
    %v225 = vsel %vm224, %v221, %v133
    %v226 = vsel %vm224, %v222, %v136
    %v227 = vsel %vm220, 1, 0
    %vm228 = vcmp.eq.s32.totalorder %v227, 1
    %v229 = vsel %vm228, %v181, %v225
    %v230 = vsel %vm228, %v182, %v226
    %v231 = vsel %vm187, %v210, %v229
    %v232 = vsel %vm187, %v211, %v230
    %233 = vst [vmem:[%s2] sm:$0xff] %v231
    %234 = vst [vmem:[%s2 + $0x8] sm:$0xff] %v232
    // Predicated region
    $region14: #{ntm_write_head_forward.1} parent=1 // pred_check
      _
    $region15: #{ntm_write_head_forward.1} parent=1 // pred_check_branch
      %236 = sbr.rel (0) target = $region17
    $region16: #{ntm_write_head_forward.1} parent=1 // pred_region
      _
    $region17: #{ntm_write_head_forward.1} parent=1 // pred_fallthru
      _
    // Predicated region
    $region18: #{ntm_write_head_forward.1} parent=1 // pred_check
      _
    $region19: #{ntm_write_head_forward.1} parent=1 // pred_check_branch
      %238 = sbr.rel (0) target = $region21
    $region20: #{ntm_write_head_forward.1} parent=1 // pred_region
      _
    $region21: #{ntm_write_head_forward.1} parent=1 // pred_fallthru
      _
    %239 = vsyncpa [#allocation3], 1

</llo_original>
